<compile_context>
chip_gen: v6e
topology: v6e:2x2x1
jax: 0.10.0
libtpu: 0.0.40
codegen_flags: <defaults>
</compile_context>

<pallas_src>
import jax
import jax.numpy as jnp
from jax.experimental import pallas as pl
from jax.experimental.pallas import tpu as pltpu


IN_DIM, HID_DIM, OUT_DIM = 34, 30, 30


def _cdiv(a, b):
    return -(-a // b)


def _round_up(n, m):
    return _cdiv(n, m) * m


def movenn_kernel(x_ref, w1_ref, b1_ref, w2_ref, b2_ref, w3_ref, b3_ref, o_ref):
    """Fused 3-layer MLP on one (tile_b, 34) batch tile.

    Batch-major activations (batch on sublanes, features on lanes).  Weights
    are pre-transposed to (in, out) so each matmul is a plain (M,K)x(K,N) MXU
    dot with the tiny weight as the stationary RHS.  Matmul operands are bf16,
    accumulation and the bias/ReLU epilogue are f32.
    """
    x = x_ref[...].astype(jnp.bfloat16)                                  # (TB, 34)

    # fc1 + relu
    h1 = jnp.dot(x, w1_ref[...], preferred_element_type=jnp.float32)    # (TB, 30)
    h1 = jnp.maximum(h1 + b1_ref[...], 0.0)

    # fc2 + relu
    h2 = jnp.dot(h1.astype(jnp.bfloat16), w2_ref[...],
                 preferred_element_type=jnp.float32)
    h2 = jnp.maximum(h2 + b2_ref[...], 0.0)

    # fc3 (no activation)
    h3 = jnp.dot(h2.astype(jnp.bfloat16), w3_ref[...],
                 preferred_element_type=jnp.float32)
    o_ref[...] = (h3 + b3_ref[...]).astype(o_ref.dtype)


def movenn_forward(x, params, *, max_tile_b=8192):
    """x: (B, 34).  params: PyTorch-layout weights w{1,2,3} [out, in] and
    biases b{1,2,3} [out].  Returns (B, 30) float32."""
    x = jnp.asarray(x, jnp.float32)
    B = x.shape[0]
    if B == 0:                                   # zero-size grid would not compile
        return jnp.zeros((0, OUT_DIM), jnp.float32)

    # --- tile / padding math -------------------------------------------------
    # Batch is the sublane (second-minor) dim of every block, so tiles only
    # need 8-row alignment.  Pick num_tiles first, then the smallest aligned
    # tile that covers B, so padding waste is at most 7 rows per tile.
    num_tiles = _cdiv(_round_up(B, 8), max_tile_b)
    if num_tiles == 1 and B >= 2048:
        num_tiles = 2                            # let v7x's 2nd TensorCore work
    if num_tiles == 1:
        tile_b = B                               # single full-extent block, no pad
    else:
        tile_b = _round_up(_cdiv(B, num_tiles), 8)
    b_pad = num_tiles * tile_b

    # Only pad (extra HBM pass over x) when actually needed.
    if b_pad == B:
        x_in = x
    else:
        x_in = jnp.zeros((b_pad, IN_DIM), jnp.float32).at[:B].set(x)

    # Weights: transpose once to (in, out) and cast to bf16 (3 KiB total —
    # a one-time op, not per-row traffic).  Biases as (1, out) rows, kept f32.
    w1 = jnp.asarray(params["w1"], jnp.float32).T.astype(jnp.bfloat16)   # (34, 30)
    w2 = jnp.asarray(params["w2"], jnp.float32).T.astype(jnp.bfloat16)   # (30, 30)
    w3 = jnp.asarray(params["w3"], jnp.float32).T.astype(jnp.bfloat16)   # (30, 30)
    b1 = jnp.asarray(params["b1"], jnp.float32).reshape(1, HID_DIM)
    b2 = jnp.asarray(params["b2"], jnp.float32).reshape(1, HID_DIM)
    b3 = jnp.asarray(params["b3"], jnp.float32).reshape(1, OUT_DIM)

    const = lambda shape: pl.BlockSpec(shape, lambda i: (0, 0))

    flops = 2 * b_pad * (IN_DIM * HID_DIM + HID_DIM * HID_DIM + HID_DIM * OUT_DIM)
    bytes_accessed = (
        b_pad * (IN_DIM + OUT_DIM) * 4
        + (IN_DIM * HID_DIM + HID_DIM * HID_DIM + HID_DIM * OUT_DIM) * 2
        + 3 * HID_DIM * 4)

    out = pl.pallas_call(
        movenn_kernel,
        out_shape=jax.ShapeDtypeStruct((b_pad, OUT_DIM), jnp.float32),
        grid=(num_tiles,),
        in_specs=[
            pl.BlockSpec((tile_b, IN_DIM), lambda i: (i, 0)),   # x batch tile
            const((IN_DIM, HID_DIM)), const((1, HID_DIM)),      # fc1 (resident)
            const((HID_DIM, HID_DIM)), const((1, HID_DIM)),     # fc2 (resident)
            const((HID_DIM, OUT_DIM)), const((1, OUT_DIM)),     # fc3 (resident)
        ],
        out_specs=pl.BlockSpec((tile_b, OUT_DIM), lambda i: (i, 0)),
        compiler_params=pltpu.CompilerParams(
            dimension_semantics=("parallel",),       # megacore split on v7x
            vmem_limit_bytes=48 * 1024 * 1024,       # headroom for 8K-row tiles
        ),
        cost_estimate=pl.CostEstimate(
            flops=flops, transcendentals=0, bytes_accessed=bytes_accessed),
    )(x_in, w1, b1, w2, b2, w3, b3)

    return out if b_pad == B else out[:B]


def init_params(key):
    """Deterministic init mimicking nn.Linear default U(-1/sqrt(fan_in), +).
    Weights in PyTorch [out, in] layout; biases as [out] vectors."""
    dims = [(IN_DIM, HID_DIM), (HID_DIM, HID_DIM), (HID_DIM, OUT_DIM)]
    params = {}
    keys = jax.random.split(key, 2 * len(dims))
    for i, (fan_in, fan_out) in enumerate(dims):
        bound = 1.0 / float(fan_in) ** 0.5
        params[f"w{i + 1}"] = jax.random.uniform(
            keys[2 * i], (fan_out, fan_in), jnp.float32, -bound, bound)
        params[f"b{i + 1}"] = jax.random.uniform(
            keys[2 * i + 1], (fan_out,), jnp.float32, -bound, bound)
    return params


def reference_forward(x, params):
    """Pure-f32 reference."""
    h1 = jnp.maximum(x @ params["w1"].T + params["b1"], 0.0)
    h2 = jnp.maximum(h1 @ params["w2"].T + params["b2"], 0.0)
    return h2 @ params["w3"].T + params["b3"]


def reference_forward_bf16(x, params):
    """Reference matching the kernel's numerics (bf16 operands, f32 accum)."""
    def lin(a, w, b):
        y = jnp.dot(a.astype(jnp.bfloat16), w.T.astype(jnp.bfloat16),
                    preferred_element_type=jnp.float32)
        return y + b
    h1 = jnp.maximum(lin(x, params["w1"], params["b1"]), 0.0)
    h2 = jnp.maximum(lin(h1, params["w2"], params["b2"]), 0.0)
    return lin(h2, params["w3"], params["b3"])


def _check(out, x, params, tag):
    ref_bf = reference_forward_bf16(x, params)
    ref_f32 = reference_forward(x, params)
    assert out.shape == (x.shape[0], OUT_DIM), (tag, out.shape)
    assert jnp.allclose(out, ref_bf, atol=5e-3, rtol=5e-3), f"mismatch vs bf16 ref ({tag})"
    assert jnp.allclose(out, ref_f32, atol=5e-2, rtol=5e-2), f"mismatch vs f32 ref ({tag})"


if __name__ == "__main__":
    key = jax.random.PRNGKey(0)
    k_x1, k_x2, k_x3, k_p = jax.random.split(key, 4)
    params = init_params(k_p)

    # Small case (matches the module's natural usage): single full-extent
    # block, no padding, no slicing.
    B = 2
    x = jax.random.normal(k_x1, (B, IN_DIM), jnp.float32)
    out = jax.block_until_ready(movenn_forward(x, params))
    _check(out, x, params, "B=2")

    # Multi-tile ragged case: 3 grid steps, padded batch, sliced result.
    B2 = 300
    x2 = jax.random.normal(k_x2, (B2, IN_DIM), jnp.float32)
    out2 = jax.block_until_ready(movenn_forward(x2, params, max_tile_b=128))
    _check(out2, x2, params, "B=300")

    # Aligned multi-tile case: 4 grid steps, pad-free fast path.
    B3 = 1024
    x3 = jax.random.normal(k_x3, (B3, IN_DIM), jnp.float32)
    out3 = jax.block_until_ready(movenn_forward(x3, params, max_tile_b=256))
    _check(out3, x3, params, "B=1024")

    print("KERNEL_OK")
</pallas_src>

<mosaic_0001>
module attributes {stable_mosaic.version = 11 : i64} {
  func.func @movenn_kernel(%arg0: i32, %arg1: memref<2x34xf32, #tpu.memory_space<vmem>>, %arg2: memref<34x30xbf16, #tpu.memory_space<vmem>>, %arg3: memref<1x30xf32, #tpu.memory_space<vmem>>, %arg4: memref<30x30xbf16, #tpu.memory_space<vmem>>, %arg5: memref<1x30xf32, #tpu.memory_space<vmem>>, %arg6: memref<30x30xbf16, #tpu.memory_space<vmem>>, %arg7: memref<1x30xf32, #tpu.memory_space<vmem>>, %arg8: memref<2x30xf32, #tpu.memory_space<vmem>>) attributes {dimension_semantics = [#tpu.dimension_semantics<parallel>], iteration_bounds = array<i64: 1>, scalar_prefetch = 0 : i64, scratch_operands = 0 : i64, tpu.core_type = #tpu.core_type<tc>, window_params = [{transform_indices = @transform_0, window_bounds = array<i64: 2, 34>}, {pipeline_mode = #tpu.pipeline_mode<synchronous>, transform_indices = @transform_1, window_bounds = array<i64: 34, 30>}, {pipeline_mode = #tpu.pipeline_mode<synchronous>, transform_indices = @transform_2, window_bounds = array<i64: 1, 30>}, {pipeline_mode = #tpu.pipeline_mode<synchronous>, transform_indices = @transform_3, window_bounds = array<i64: 30, 30>}, {pipeline_mode = #tpu.pipeline_mode<synchronous>, transform_indices = @transform_4, window_bounds = array<i64: 1, 30>}, {pipeline_mode = #tpu.pipeline_mode<synchronous>, transform_indices = @transform_5, window_bounds = array<i64: 30, 30>}, {pipeline_mode = #tpu.pipeline_mode<synchronous>, transform_indices = @transform_6, window_bounds = array<i64: 1, 30>}, {transform_indices = @transform_7, window_bounds = array<i64: 2, 30>}]} {
    %c0 = arith.constant 0 : index
    %c0_0 = arith.constant 0 : index
    %0 = vector.load %arg1[%c0, %c0_0] : memref<2x34xf32, #tpu.memory_space<vmem>>, vector<2x34xf32>
    %1 = arith.truncf %0 : vector<2x34xf32> to vector<2x34xbf16>
    %c0_1 = arith.constant 0 : index
    %c0_2 = arith.constant 0 : index
    %2 = vector.load %arg2[%c0_1, %c0_2] : memref<34x30xbf16, #tpu.memory_space<vmem>>, vector<34x30xbf16>
    %cst = arith.constant dense<0.000000e+00> : vector<2x30xf32>
    %3 = tpu.matmul %1, %2, %cst {dimension_numbers = #tpu.dot_dimension_numbers<[1], [0], [0], [1], [0, 0, 1, 1], [], []>} : vector<2x34xbf16>, vector<34x30xbf16>, vector<2x30xf32> -> vector<2x30xf32>
    %c0_3 = arith.constant 0 : index
    %c0_4 = arith.constant 0 : index
    %4 = vector.load %arg3[%c0_3, %c0_4] : memref<1x30xf32, #tpu.memory_space<vmem>>, vector<1x30xf32>
    %5 = vector.broadcast %4 : vector<1x30xf32> to vector<2x30xf32>
    %6 = arith.addf %3, %5 : vector<2x30xf32>
    %cst_5 = arith.constant 0.000000e+00 : f32
    %7 = vector.broadcast %cst_5 : f32 to vector<2x30xf32>
    %8 = arith.maximumf %6, %7 : vector<2x30xf32>
    %9 = arith.truncf %8 : vector<2x30xf32> to vector<2x30xbf16>
    %c0_6 = arith.constant 0 : index
    %c0_7 = arith.constant 0 : index
    %10 = vector.load %arg4[%c0_6, %c0_7] : memref<30x30xbf16, #tpu.memory_space<vmem>>, vector<30x30xbf16>
    %cst_8 = arith.constant dense<0.000000e+00> : vector<2x30xf32>
    %11 = tpu.matmul %9, %10, %cst_8 {dimension_numbers = #tpu.dot_dimension_numbers<[1], [0], [0], [1], [0, 0, 1, 1], [], []>} : vector<2x30xbf16>, vector<30x30xbf16>, vector<2x30xf32> -> vector<2x30xf32>
    %c0_9 = arith.constant 0 : index
    %c0_10 = arith.constant 0 : index
    %12 = vector.load %arg5[%c0_9, %c0_10] : memref<1x30xf32, #tpu.memory_space<vmem>>, vector<1x30xf32>
    %13 = vector.broadcast %12 : vector<1x30xf32> to vector<2x30xf32>
    %14 = arith.addf %11, %13 : vector<2x30xf32>
    %cst_11 = arith.constant 0.000000e+00 : f32
    %15 = vector.broadcast %cst_11 : f32 to vector<2x30xf32>
    %16 = arith.maximumf %14, %15 : vector<2x30xf32>
    %17 = arith.truncf %16 : vector<2x30xf32> to vector<2x30xbf16>
    %c0_12 = arith.constant 0 : index
    %c0_13 = arith.constant 0 : index
    %18 = vector.load %arg6[%c0_12, %c0_13] : memref<30x30xbf16, #tpu.memory_space<vmem>>, vector<30x30xbf16>
    %cst_14 = arith.constant dense<0.000000e+00> : vector<2x30xf32>
    %19 = tpu.matmul %17, %18, %cst_14 {dimension_numbers = #tpu.dot_dimension_numbers<[1], [0], [0], [1], [0, 0, 1, 1], [], []>} : vector<2x30xbf16>, vector<30x30xbf16>, vector<2x30xf32> -> vector<2x30xf32>
    %c0_15 = arith.constant 0 : index
    %c0_16 = arith.constant 0 : index
    %20 = vector.load %arg7[%c0_15, %c0_16] : memref<1x30xf32, #tpu.memory_space<vmem>>, vector<1x30xf32>
    %21 = vector.broadcast %20 : vector<1x30xf32> to vector<2x30xf32>
    %22 = arith.addf %19, %21 : vector<2x30xf32>
    %c0_17 = arith.constant 0 : index
    %c0_18 = arith.constant 0 : index
    %23 = vector.load %arg8[%c0_17, %c0_18] : memref<2x30xf32, #tpu.memory_space<vmem>>, vector<2x30xf32>
    tpu.vector_store %arg8[%c0_17, %c0_18], %22 {strides = array<i32>} : memref<2x30xf32, #tpu.memory_space<vmem>>, vector<2x30xf32>,
    return
  }
  func.func @transform_0(%arg0: i32) -> (i32, i32) {
    %c0_i32 = arith.constant 0 : i32
    %c0_i32_0 = arith.constant 0 : i32
    return %arg0, %c0_i32 : i32, i32
  }
  func.func @transform_1(%arg0: i32) -> (i32, i32) {
    %c0_i32 = arith.constant 0 : i32
    %c0_i32_0 = arith.constant 0 : i32
    %c0_i32_1 = arith.constant 0 : i32
    return %c0_i32, %c0_i32_0 : i32, i32
  }
  func.func @transform_2(%arg0: i32) -> (i32, i32) {
    %c0_i32 = arith.constant 0 : i32
    %c0_i32_0 = arith.constant 0 : i32
    %c0_i32_1 = arith.constant 0 : i32
    return %c0_i32, %c0_i32_0 : i32, i32
  }
  func.func @transform_3(%arg0: i32) -> (i32, i32) {
    %c0_i32 = arith.constant 0 : i32
    %c0_i32_0 = arith.constant 0 : i32
    %c0_i32_1 = arith.constant 0 : i32
    return %c0_i32, %c0_i32_0 : i32, i32
  }
  func.func @transform_4(%arg0: i32) -> (i32, i32) {
    %c0_i32 = arith.constant 0 : i32
    %c0_i32_0 = arith.constant 0 : i32
    %c0_i32_1 = arith.constant 0 : i32
    return %c0_i32, %c0_i32_0 : i32, i32
  }
  func.func @transform_5(%arg0: i32) -> (i32, i32) {
    %c0_i32 = arith.constant 0 : i32
    %c0_i32_0 = arith.constant 0 : i32
    %c0_i32_1 = arith.constant 0 : i32
    return %c0_i32, %c0_i32_0 : i32, i32
  }
  func.func @transform_6(%arg0: i32) -> (i32, i32) {
    %c0_i32 = arith.constant 0 : i32
    %c0_i32_0 = arith.constant 0 : i32
    %c0_i32_1 = arith.constant 0 : i32
    return %c0_i32, %c0_i32_0 : i32, i32
  }
  func.func @transform_7(%arg0: i32) -> (i32, i32) {
    %c0_i32 = arith.constant 0 : i32
    %c0_i32_0 = arith.constant 0 : i32
    return %arg0, %c0_i32 : i32, i32
  }
}

</mosaic_0001>

<llo_original>
// kernel: tpu_custom_call.1
$region0: #{tpu_custom_call.1}
  #allocation0 [shape = 'u32[]', space=smem, size = 0x4, offset = 0x4, fixed_abs, tag = 'smem constant byte address 0x4 - core index']
  #allocation1 [shape = 'u32[144,128]{1,0:T(1,128)}', space=vmem, size = 0x12000, scoped, tag = 'internal scratch']
  %s0 = inlined_call_operand.vmem [shape: f32[2,34], index: 0, kind: input, shape index: {}]
  %s1 = inlined_call_operand.vmem [shape: bf16[34,30], index: 1, kind: input, shape index: {}]
  %s2 = inlined_call_operand.vmem [shape: f32[1,30], index: 2, kind: input, shape index: {}]
  %s3 = inlined_call_operand.vmem [shape: bf16[30,30], index: 3, kind: input, shape index: {}]
  %s4 = inlined_call_operand.vmem [shape: f32[1,30], index: 4, kind: input, shape index: {}]
  %s5 = inlined_call_operand.vmem [shape: bf16[30,30], index: 5, kind: input, shape index: {}]
  %s6 = inlined_call_operand.vmem [shape: f32[1,30], index: 6, kind: input, shape index: {}]
  %s7 = inlined_call_operand.hbm [shape: f32[2,30], index: 7, kind: output, shape index: {}]
  %s8 = sld [smem:[#allocation0]]
  $region38: #{tpu_custom_call.1} parent=0
    _
  %s10 = ssub.s32 1, %s8
  %s11 = scalar_select 0, %s10, %s8
  $region1: #{tpu_custom_call.1} parent=0
    #allocation2 [shape = 'u8[1024]{0}', space=vmem, size = 0x400, scoped, tag = 'output window, operand 0, single buffered']
    #allocation3 [shape = 's32[1]{0}', space=sflag, size = 0x4, scoped, tag = 'scoped memory for tpu_custom_call.1']
    %12 = vsyncpa [#allocation3], 0
    // Predicated region
    $region2: #{tpu_custom_call.1} parent=1 // pred_check
      _
    $region3: #{tpu_custom_call.1} parent=1 // pred_check_branch
      %14 = sbr.rel (0) target = $region5
    $region4: #{tpu_custom_call.1} parent=1 // pred_region
      _
    $region5: #{tpu_custom_call.1} parent=1 // pred_fallthru
      _
    // Predicated region
    $region6: #{tpu_custom_call.1} parent=1 // pred_check
      _
    $region7: #{tpu_custom_call.1} parent=1 // pred_check_branch
      %16 = sbr.rel (0) target = $region9
    $region8: #{tpu_custom_call.1} parent=1 // pred_region
      _
    $region9: #{tpu_custom_call.1} parent=1 // pred_fallthru
      _
    // Predicated region
    $region10: #{tpu_custom_call.1} parent=1 // pred_check
      _
    $region11: #{tpu_custom_call.1} parent=1 // pred_check_branch
      %18 = sbr.rel (0) target = $region13
    $region12: #{tpu_custom_call.1} parent=1 // pred_region
      _
    $region13: #{tpu_custom_call.1} parent=1 // pred_fallthru
      _
    // Predicated region
    $region14: #{tpu_custom_call.1} parent=1 // pred_check
      _
    $region15: #{tpu_custom_call.1} parent=1 // pred_check_branch
      %20 = sbr.rel (0) target = $region17
    $region16: #{tpu_custom_call.1} parent=1 // pred_region
      _
    $region17: #{tpu_custom_call.1} parent=1 // pred_fallthru
      _
    // Predicated region
    $region18: #{tpu_custom_call.1} parent=1 // pred_check
      _
    $region19: #{tpu_custom_call.1} parent=1 // pred_check_branch
      %22 = sbr.rel (0) target = $region21
    $region20: #{tpu_custom_call.1} parent=1 // pred_region
      _
    $region21: #{tpu_custom_call.1} parent=1 // pred_fallthru
      _
    // Predicated region
    $region22: #{tpu_custom_call.1} parent=1 // pred_check
      _
    $region23: #{tpu_custom_call.1} parent=1 // pred_check_branch
      %24 = sbr.rel (0) target = $region25
    $region24: #{tpu_custom_call.1} parent=1 // pred_region
      _
    $region25: #{tpu_custom_call.1} parent=1 // pred_fallthru
      _
    // Predicated region
    $region26: #{tpu_custom_call.1} parent=1 // pred_check
      _
    $region27: #{tpu_custom_call.1} parent=1 // pred_check_branch
      %26 = sbr.rel (0) target = $region29
    $region28: #{tpu_custom_call.1} parent=1 // pred_region
      _
    $region29: #{tpu_custom_call.1} parent=1 // pred_fallthru
      _
    %v28 = vld [vmem:[%s0] sm:$0x3]
    %v29 = vpack.c.bf16 %v28, %v28
    %v30 = vld [vmem:[%s1] sm:$0xf]
    %v31 = vld [vmem:[%s1 + $0x4] sm:$0xf]
    %v32 = vld [vmem:[%s1 + $0x8] sm:$0xf]
    %v33 = vld [vmem:[%s1 + $0xc] sm:$0xf]
    %v34 = vld [vmem:[%s1 + $0x10] sm:$0x1]
    %v35 = vld [vmem:[%s2] sm:$0x1]
    %v37 = vlaneseq
    %v38 = vshrl.u32 %v37, 7
    %v39 = vsub.s32 0, %v38
    %v40 = vrot.slane %v35, %v39
    %v47 = vunpack.c.l.b16 %v30
    %v48 = vunpack.c.l.b16 %v31
    %v49 = vunpack.c.l.b16 %v32
    %v50 = vunpack.c.l.b16 %v33
    %v51 = vunpack.c.l.b16 %v34
    %v52 = vpack.c.b16 %v48, %v47
    %v53 = vpack.c.b16 %v50, %v49
    %v54 = vpack.c.b16 %v51, %v51
    %vm57 = vcmask 277504
    %v59 = vsel %vm57, %v29, 0
    %vm61 = vcmask 1040384
    %v63 = vsel %vm61, %v54, 0
    %65 = vmatprep.subr.bf16.mxu0 0
    %66 = vmatpush1.bf16.msra.mxu0 0
    %67 = vmatprep.subr.bf16.mxu0 0
    %68 = vmatpush1.bf16.msra.mxu0 0
    %69 = vmatprep.subr.bf16.mxu0 0
    %70 = vmatpush1.bf16.msra.mxu0 0
    %71 = vmatprep.subr.bf16.mxu0 0
    %72 = vmatpush1.bf16.msra.mxu0 0
    %73 = vmatprep.subr.bf16.mxu0 0
    %74 = vmatpush1.bf16.msra.mxu0 0
    %75 = vmatprep.subr.bf16.mxu0 0
    %76 = vmatpush1.bf16.msra.mxu0 %v63
    %77 = vmatprep.subr.bf16.mxu0 0
    %78 = vmatpush1.bf16.msra.mxu0 %v53
    %79 = vmatprep.subr.bf16.mxu0 0
    %80 = vmatpush1.bf16.msra.mxu0 %v52
    %81 = vmatprep.subr.bf16.mxu0 0
    %82 = vmatpush2.bf16.msra.mxu0 0
    %83 = vmatprep.subr.bf16.mxu0 0
    %84 = vmatpush2.bf16.msra.mxu0 0
    %85 = vmatprep.subr.bf16.mxu0 0
    %86 = vmatpush2.bf16.msra.mxu0 0
    %87 = vmatprep.subr.bf16.mxu0 0
    %88 = vmatpush2.bf16.msra.mxu0 0
    %89 = vmatprep.subr.bf16.mxu0 0
    %90 = vmatpush2.bf16.msra.mxu0 0
    %91 = vmatprep.subr.bf16.mxu0 0
    %92 = vmatpush2.bf16.msra.mxu0 0
    %93 = vmatprep.subr.bf16.mxu0 0
    %94 = vmatpush2.bf16.msra.mxu0 0
    %95 = vmatprep.subr.bf16.mxu0 0
    %96 = vmatpush2.bf16.msra.mxu0 0
    %97 = vmatprep.mubr.bf16.mxu0 0
    %98 = vmatmul.mubr.bf16.gmra.mxu0 %v59
    %v99 = vpop.f32.mrf.mxu0
    %v100 = vadd.f32 %v40, %v99
    %v101 = vpop.f32.mrf.mxu0
    %v102 = vpop.f32.mrf.mxu0
    %v103 = vpop.f32.mrf.mxu0
    %104 = vdwg.mxu0
    %v105 = vmax.f32 %v100, 0.0
    %v106 = vpack.c.bf16 %v105, %v105
    %v107 = vld [vmem:[%s3] sm:$0xf]
    %v108 = vld [vmem:[%s3 + $0x4] sm:$0xf]
    %v109 = vld [vmem:[%s3 + $0x8] sm:$0xf]
    %v110 = vld [vmem:[%s3 + $0xc] sm:$0x7]
    %v111 = vld [vmem:[%s4] sm:$0x1]
    %v113 = vlaneseq
    %v114 = vshrl.u32 %v113, 7
    %v115 = vsub.s32 0, %v114
    %v116 = vrot.slane %v111, %v115
    %v122 = vunpack.c.l.b16 %v107
    %v123 = vunpack.c.l.b16 %v108
    %v124 = vunpack.c.l.b16 %v109
    %v125 = vunpack.c.l.b16 %v110
    %v126 = vpack.c.b16 %v123, %v122
    %v127 = vpack.c.b16 %v125, %v124
    %vm129 = vcmask 244736
    %v131 = vsel %vm129, %v106, 0
    %vm133 = vcmask 1046528
    %v135 = vsel %vm133, %v127, 0
    %137 = vmatprep.subr.bf16.mxu0 0
    %138 = vmatpush1.bf16.msra.mxu0 0
    %139 = vmatprep.subr.bf16.mxu0 0
    %140 = vmatpush1.bf16.msra.mxu0 0
    %141 = vmatprep.subr.bf16.mxu0 0
    %142 = vmatpush1.bf16.msra.mxu0 0
    %143 = vmatprep.subr.bf16.mxu0 0
    %144 = vmatpush1.bf16.msra.mxu0 0
    %145 = vmatprep.subr.bf16.mxu0 0
    %146 = vmatpush1.bf16.msra.mxu0 0
    %147 = vmatprep.subr.bf16.mxu0 0
    %148 = vmatpush1.bf16.msra.mxu0 0
    %149 = vmatprep.subr.bf16.mxu0 0
    %150 = vmatpush1.bf16.msra.mxu0 %v135
    %151 = vmatprep.subr.bf16.mxu0 0
    %152 = vmatpush1.bf16.msra.mxu0 %v126
    %153 = vmatprep.subr.bf16.mxu0 0
    %154 = vmatpush2.bf16.msra.mxu0 0
    %155 = vmatprep.subr.bf16.mxu0 0
    %156 = vmatpush2.bf16.msra.mxu0 0
    %157 = vmatprep.subr.bf16.mxu0 0
    %158 = vmatpush2.bf16.msra.mxu0 0
    %159 = vmatprep.subr.bf16.mxu0 0
    %160 = vmatpush2.bf16.msra.mxu0 0
    %161 = vmatprep.subr.bf16.mxu0 0
    %162 = vmatpush2.bf16.msra.mxu0 0
    %163 = vmatprep.subr.bf16.mxu0 0
    %164 = vmatpush2.bf16.msra.mxu0 0
    %165 = vmatprep.subr.bf16.mxu0 0
    %166 = vmatpush2.bf16.msra.mxu0 0
    %167 = vmatprep.subr.bf16.mxu0 0
    %168 = vmatpush2.bf16.msra.mxu0 0
    %169 = vmatprep.mubr.bf16.mxu0 0
    %170 = vmatmul.mubr.bf16.gmra.mxu0 %v131
    %v171 = vpop.f32.mrf.mxu0
    %v172 = vadd.f32 %v116, %v171
    %v173 = vpop.f32.mrf.mxu0
    %v174 = vpop.f32.mrf.mxu0
    %v175 = vpop.f32.mrf.mxu0
    %176 = vdwg.mxu0
    %v177 = vmax.f32 %v172, 0.0
    %v178 = vpack.c.bf16 %v177, %v177
    %v179 = vld [vmem:[%s5] sm:$0xf]
    %v180 = vld [vmem:[%s5 + $0x4] sm:$0xf]
    %v181 = vld [vmem:[%s5 + $0x8] sm:$0xf]
    %v182 = vld [vmem:[%s5 + $0xc] sm:$0x7]
    %v183 = vld [vmem:[%s6] sm:$0x1]
    %v185 = vlaneseq
    %v186 = vshrl.u32 %v185, 7
    %v187 = vsub.s32 0, %v186
    %v188 = vrot.slane %v183, %v187
    %v194 = vunpack.c.l.b16 %v179
    %v195 = vunpack.c.l.b16 %v180
    %v196 = vunpack.c.l.b16 %v181
    %v197 = vunpack.c.l.b16 %v182
    %v198 = vpack.c.b16 %v195, %v194
    %v199 = vpack.c.b16 %v197, %v196
    %v202 = vsel %vm129, %v178, 0
    %v205 = vsel %vm133, %v199, 0
    %207 = vmatprep.subr.bf16.mxu0 0
    %208 = vmatpush1.bf16.msra.mxu0 0
    %209 = vmatprep.subr.bf16.mxu0 0
    %210 = vmatpush1.bf16.msra.mxu0 0
    %211 = vmatprep.subr.bf16.mxu0 0
    %212 = vmatpush1.bf16.msra.mxu0 0
    %213 = vmatprep.subr.bf16.mxu0 0
    %214 = vmatpush1.bf16.msra.mxu0 0
    %215 = vmatprep.subr.bf16.mxu0 0
    %216 = vmatpush1.bf16.msra.mxu0 0
    %217 = vmatprep.subr.bf16.mxu0 0
    %218 = vmatpush1.bf16.msra.mxu0 0
    %219 = vmatprep.subr.bf16.mxu0 0
    %220 = vmatpush1.bf16.msra.mxu0 %v205
    %221 = vmatprep.subr.bf16.mxu0 0
    %222 = vmatpush1.bf16.msra.mxu0 %v198
    %223 = vmatprep.subr.bf16.mxu0 0
    %224 = vmatpush2.bf16.msra.mxu0 0
    %225 = vmatprep.subr.bf16.mxu0 0
    %226 = vmatpush2.bf16.msra.mxu0 0
    %227 = vmatprep.subr.bf16.mxu0 0
    %228 = vmatpush2.bf16.msra.mxu0 0
    %229 = vmatprep.subr.bf16.mxu0 0
    %230 = vmatpush2.bf16.msra.mxu0 0
    %231 = vmatprep.subr.bf16.mxu0 0
    %232 = vmatpush2.bf16.msra.mxu0 0
    %233 = vmatprep.subr.bf16.mxu0 0
    %234 = vmatpush2.bf16.msra.mxu0 0
    %235 = vmatprep.subr.bf16.mxu0 0
    %236 = vmatpush2.bf16.msra.mxu0 0
    %237 = vmatprep.subr.bf16.mxu0 0
    %238 = vmatpush2.bf16.msra.mxu0 0
    %239 = vmatprep.mubr.bf16.mxu0 0
    %240 = vmatmul.mubr.bf16.gmra.mxu0 %v202
    %v241 = vpop.f32.mrf.mxu0
    %v242 = vadd.f32 %v188, %v241
    %v243 = vpop.f32.mrf.mxu0
    %v244 = vpop.f32.mrf.mxu0
    %v245 = vpop.f32.mrf.mxu0
    %246 = vdwg.mxu0
    %vm247 = vcmask 238592
    %248 = vst.msk [vmem:[#allocation2] sm:$0x3] %vm247, %v242
    // Predicated region
    $region30: #{tpu_custom_call.1} parent=1 // pred_check
      _
    $region31: #{tpu_custom_call.1} parent=1 // pred_check_branch
      %250 = sbr.rel (0) target = $region33
    $region32: #{tpu_custom_call.1} parent=1 // pred_region
      %s252 = ssub.s32 32, 32
      %253 = vsyncadd [#allocation3], %s252
      %s255 = sshll.u32 [#allocation2], 4
      %s256 = int_to_ptr.vmem [resolvable:$true] %s255
      %258 = dma.vmem_to_hbm [thread:$0]  %s256, 32, %s7, [#allocation3]
    $region33: #{tpu_custom_call.1} parent=1 // pred_fallthru
      _
    // Predicated region
    $region34: #{tpu_custom_call.1} parent=1 // pred_check
      _
    $region35: #{tpu_custom_call.1} parent=1 // pred_check_branch
      %260 = sbr.rel (0) target = $region37
    $region36: #{tpu_custom_call.1} parent=1 // pred_region
      %261 = dma.done [#allocation3], 32
    $region37: #{tpu_custom_call.1} parent=1 // pred_fallthru
      _
    %262 = vsyncpa [#allocation3], 1

</llo_original>
